<compile_context>
chip_gen: v6e
topology: v6e:2x2x1
jax: 0.10.0
libtpu: 0.0.40
codegen_flags: <defaults>
</compile_context>

<pallas_src>
import math
import numpy as np
import jax
import jax.numpy as jnp
from jax.experimental import pallas as pl
from jax.experimental.pallas import tpu as pltpu

# ----------------------- model hyper-params (synthetic) ---------------------
B, C_IN, H, W = 2, 4, 16, 16           # input image
D_IN = C_IN * H * W                    # 1024 after flatten
EMB_SIZE = 32                          # embedding_model.out_features
N_CLASSES_BASE = 8
TRAIN_WITH_SIDE_LABELS = True
N_CLASSES = N_CLASSES_BASE * 2 if TRAIN_WITH_SIDE_LABELS else N_CLASSES_BASE  # 16
HEADS_W = 2 * N_CLASSES                # binary + arcface columns, fused
OUT_W = EMB_SIZE + HEADS_W             # single kernel output width (= 64 lanes)

S = 64.0                               # scale (both heads)
M = 0.5                                # arcface margin
COS_M = math.cos(M)
SIN_M = math.sin(M)
MM = SIN_M * M
THRESHOLD = math.cos(math.pi - M)
EPS = 1e-12                            # l2-norm eps (all-zero row / batch padding safety)


def _default_batch_tile():
    """Per-chip batch-tile default (the kernel is bound by the x HBM stream).

    v5e/v6e: 512-row tiles reach ~85% of HBM roofline.
    v7x: ~3.2 TB/s HBM makes the fixed ~0.35us per-grid-step overhead dominate small
         tiles, so use 1024 (2 x 4 MiB f32 x buffers -- far under the 32 MiB scoped VMEM).
    """
    try:
        kind = jax.devices()[0].device_kind.lower()
    except Exception:
        return 512
    if "v7" in kind or "7x" in kind:
        return 1024
    return 512


# --------------------------------- kernel -----------------------------------
def multihead_kernel(x_ref, we_ref, be_ref, wcat_ref, bcat_ref, tgt_ref, out_ref):
    # 1) embedding model (flatten + Linear).  x arrives f32 and is cast to bf16 in vregs
    #    (VPU cast hides under the x DMA); f32 accumulation kept on the MXU.
    emb = jnp.dot(x_ref[...].astype(jnp.bfloat16), we_ref[...],
                  preferred_element_type=jnp.float32) + be_ref[...]

    # 2) l2_norm(emb, axis=1): rsqrt (EUP) with eps clamp -- shortest dependency chain
    #    between the two matmuls, and NaN-safe for zero/padded rows.
    fea = emb * jax.lax.rsqrt(
        jnp.maximum(jnp.sum(emb * emb, axis=1, keepdims=True), EPS))

    # 3) fused heads: ONE MXU call computes [binary | arcface] columns.
    #    wcat's arcface half is already column-l2-normalized (folded at param-prep time);
    #    bcat is [bb | 0].
    heads = jnp.dot(fea, wcat_ref[...],
                    preferred_element_type=jnp.float32) + bcat_ref[...]

    # 4) ArcFace margin on the arcface half only, at the target class column only.
    #    Mask built in-kernel from the int32 target column (no one_hot input DMA).
    bt = heads.shape[0]
    col = jax.lax.broadcasted_iota(jnp.int32, (bt, HEADS_W), 1)
    is_arc = col >= N_CLASSES
    tgt = tgt_ref[...]                                      # [bt, 1] int32
    is_target = jnp.logical_and(is_arc, (col - N_CLASSES) == tgt)

    cos = jnp.clip(heads, -1.0, 1.0)
    sin = jnp.sqrt(jnp.maximum(1.0 - cos * cos, 0.0))
    cos_theta_m = cos * COS_M - sin * SIN_M
    # easy-margin fallback: where cos(theta) <= cos(pi - m), use cos - m*sin(m)
    cos_theta_m = jnp.where((cos - THRESHOLD) <= 0.0, cos - MM, cos_theta_m)
    arc = jnp.where(is_target, cos_theta_m, cos)
    heads_out = jnp.where(is_arc, arc, heads) * S           # binary half untouched

    # 5) single lane-contiguous [bt, EMB_SIZE + 2C] store -> one writeback instead of two
    #    32-lane masked partial stores.
    out_ref[...] = jnp.concatenate([emb, heads_out], axis=-1)


# ------------------------- param preparation (hoisted) ------------------------
def prepare_params(params):
    """Pure function of the (frozen) parameters; run once at param-load time.

    * casts the big embedding weight to bf16 (MXU operand; accumulation stays f32)
    * folds the ArcFace column l2-normalization into the weight
    * concatenates binary + arcface weights so the two head matmuls fuse into one.
    """
    warc = params["warc"]
    inv_wnorm = jax.lax.rsqrt(jnp.sum(warc * warc, axis=0, keepdims=True))
    w_cat = jnp.concatenate([params["wb"], warc * inv_wnorm], axis=1)          # [E, 2C]
    b_cat = jnp.concatenate([params["bb"],
                             jnp.zeros((1, N_CLASSES), jnp.float32)], axis=1)  # [1, 2C]
    return {
        "we": params["we"].astype(jnp.bfloat16),   # [D_IN, E]
        "be": params["be"],                        # [1, E]
        "w_cat": w_cat,                            # [E, 2C]
        "b_cat": b_cat,                            # [1, 2C]
    }


# --------------------------------- wrapper -----------------------------------
def multihead_forward(x, target, prep, *, batch_tile=None, x_buffers=None):
    """Returns dict with 'emb', 'logits', 'arcface_logits' (target is int32 [B]).

    batch_tile: rows per grid step (None -> per-chip default: 512 v5e/v6e, 1024 v7x).
    x_buffers:  optional pipeline depth for the x stream (e.g. 3); None keeps default 2.
    """
    b = x.shape[0]
    x_flat = x.reshape(b, -1)                       # f32; bf16 cast happens IN the kernel
    tgt = target.reshape(b, 1).astype(jnp.int32)    # tiny int32 column, no one_hot

    bt = batch_tile if batch_tile is not None else _default_batch_tile()
    if b <= bt:
        bt = b
        pb = b
    else:
        pb = pl.cdiv(b, bt) * bt                    # tail handling: zero-pad last tile
        if pb != b:
            x_flat = jnp.pad(x_flat, ((0, pb - b), (0, 0)))
            tgt = jnp.pad(tgt, ((0, pb - b), (0, 0)))
    grid = (pb // bt,)
    # NOTE(v7x): both TensorCores only get work when the grid has >= 2 steps (B >= 2*bt);
    # duplicated resident weights (~80 KiB) per TC are negligible.

    x_spec_kwargs = {} if x_buffers is None else {"pipeline_mode": pl.Buffered(x_buffers)}

    out = pl.pallas_call(
        multihead_kernel,
        grid=grid,
        in_specs=[
            pl.BlockSpec((bt, D_IN), lambda i: (i, 0), **x_spec_kwargs),  # x     (streamed)
            pl.BlockSpec((D_IN, EMB_SIZE), lambda i: (0, 0)),             # We    (resident)
            pl.BlockSpec((1, EMB_SIZE), lambda i: (0, 0)),                # be    (resident)
            pl.BlockSpec((EMB_SIZE, HEADS_W), lambda i: (0, 0)),          # [wb|wn] resident
            pl.BlockSpec((1, HEADS_W), lambda i: (0, 0)),                 # [bb|0]  resident
            pl.BlockSpec((bt, 1), lambda i: (i, 0)),                      # target (streamed)
        ],
        out_specs=pl.BlockSpec((bt, OUT_W), lambda i: (i, 0)),
        out_shape=jax.ShapeDtypeStruct((pb, OUT_W), jnp.float32),
        compiler_params=pltpu.CompilerParams(
            dimension_semantics=("parallel",)),
    )(x_flat, prep["we"], prep["be"], prep["w_cat"], prep["b_cat"], tgt)

    emb = out[:b, :EMB_SIZE]
    logits = out[:b, EMB_SIZE:EMB_SIZE + N_CLASSES]
    arc = out[:b, EMB_SIZE + N_CLASSES:]
    return {"emb": emb, "logits": logits, "arcface_logits": arc}


# ----------------------------- pure-JAX reference ----------------------------
def reference_forward(x, target, params):
    """Reference with the same numerics policy as the kernel: bf16 operands / f32
    accumulation for the D_IN=1024 embedding matmul, f32 everywhere else.
    (The ~1e-2 relative deviation from a fully-f32 PyTorch forward on the s=64-scaled
    logits is the standard bf16 mixed-precision tradeoff, stated for downstream users.)"""
    b = x.shape[0]
    x_flat = x.reshape(b, -1)
    emb = jnp.dot(x_flat.astype(jnp.bfloat16), params["we"].astype(jnp.bfloat16),
                  preferred_element_type=jnp.float32) + params["be"]
    fea = emb / jnp.sqrt(jnp.maximum(jnp.sum(emb * emb, axis=1, keepdims=True), EPS))
    logits = (fea @ params["wb"] + params["bb"]) * S
    w = params["warc"]
    wn = w / jnp.sqrt(jnp.sum(w * w, axis=0, keepdims=True))
    cos = jnp.clip(fea @ wn, -1.0, 1.0)
    sin = jnp.sqrt(jnp.maximum(1.0 - cos * cos, 0.0))
    ctm = cos * COS_M - sin * SIN_M
    ctm = jnp.where((cos - THRESHOLD) <= 0.0, cos - MM, ctm)
    onehot = jax.nn.one_hot(target, N_CLASSES, dtype=jnp.float32)
    arc = jnp.where(onehot > 0.0, ctm, cos) * S
    return {"emb": emb, "logits": logits, "arcface_logits": arc}


# ------------------------------------ main ------------------------------------
if __name__ == "__main__":
    key = jax.random.PRNGKey(0)
    k_x, k_we, k_be, k_wb, k_bb, k_warc, k_t = jax.random.split(key, 7)

    # Deterministic synthetic parameters (no checkpoint).
    params = {
        # embedding_model: flatten + Linear(D_IN, EMB_SIZE)
        "we":  jax.random.normal(k_we, (D_IN, EMB_SIZE), jnp.float32) * (1.0 / math.sqrt(D_IN)),
        "be":  jax.random.normal(k_be, (1, EMB_SIZE), jnp.float32) * 0.01,
        # BinaryHead.fc: Linear(EMB_SIZE, N_CLASSES)  (stored already transposed [E, C])
        "wb":  jax.random.normal(k_wb, (EMB_SIZE, N_CLASSES), jnp.float32) * (1.0 / math.sqrt(EMB_SIZE)),
        "bb":  jax.random.normal(k_bb, (1, N_CLASSES), jnp.float32) * 0.01,
        # MarginHead.fc (MarginLinear / ArcFace) kernel: [E, C]
        "warc": jax.random.uniform(k_warc, (EMB_SIZE, N_CLASSES), jnp.float32, -1.0, 1.0),
    }

    x = jax.random.normal(k_x, (B, C_IN, H, W), jnp.float32)
    target = jax.random.randint(k_t, (B,), 0, N_CLASSES, jnp.int32)

    prep = prepare_params(params)           # hoisted once (pure function of frozen params)
    out = multihead_forward(x, target, prep)
    jax.block_until_ready(out)

    ref = reference_forward(x, target, params)
    for name in ("emb", "logits", "arcface_logits"):
        np.testing.assert_allclose(np.asarray(out[name]), np.asarray(ref[name]),
                                   rtol=2e-3, atol=2e-3)

    print("KERNEL_OK")
</pallas_src>

<mosaic_0001>
module attributes {stable_mosaic.version = 11 : i64} {
  func.func @multihead_kernel(%arg0: i32, %arg1: memref<2x1024xf32, #tpu.memory_space<vmem>>, %arg2: memref<1024x32xbf16, #tpu.memory_space<vmem>>, %arg3: memref<1x32xf32, #tpu.memory_space<vmem>>, %arg4: memref<32x32xf32, #tpu.memory_space<vmem>>, %arg5: memref<1x32xf32, #tpu.memory_space<vmem>>, %arg6: memref<2x1xi32, #tpu.memory_space<vmem>>, %arg7: memref<2x64xf32, #tpu.memory_space<vmem>>) attributes {dimension_semantics = [#tpu.dimension_semantics<parallel>], iteration_bounds = array<i64: 1>, scalar_prefetch = 0 : i64, scratch_operands = 0 : i64, tpu.core_type = #tpu.core_type<tc>, window_params = [{transform_indices = @transform_0, window_bounds = array<i64: 2, 1024>}, {pipeline_mode = #tpu.pipeline_mode<synchronous>, transform_indices = @transform_1, window_bounds = array<i64: 1024, 32>}, {pipeline_mode = #tpu.pipeline_mode<synchronous>, transform_indices = @transform_2, window_bounds = array<i64: 1, 32>}, {pipeline_mode = #tpu.pipeline_mode<synchronous>, transform_indices = @transform_3, window_bounds = array<i64: 32, 32>}, {pipeline_mode = #tpu.pipeline_mode<synchronous>, transform_indices = @transform_4, window_bounds = array<i64: 1, 32>}, {transform_indices = @transform_5, window_bounds = array<i64: 2, 1>}, {transform_indices = @transform_6, window_bounds = array<i64: 2, 64>}]} {
    %c0 = arith.constant 0 : index
    %c0_0 = arith.constant 0 : index
    %0 = vector.load %arg1[%c0, %c0_0] : memref<2x1024xf32, #tpu.memory_space<vmem>>, vector<2x1024xf32>
    %1 = arith.truncf %0 : vector<2x1024xf32> to vector<2x1024xbf16>
    %c0_1 = arith.constant 0 : index
    %c0_2 = arith.constant 0 : index
    %2 = vector.load %arg2[%c0_1, %c0_2] : memref<1024x32xbf16, #tpu.memory_space<vmem>>, vector<1024x32xbf16>
    %cst = arith.constant dense<0.000000e+00> : vector<2x32xf32>
    %3 = tpu.matmul %1, %2, %cst {dimension_numbers = #tpu.dot_dimension_numbers<[1], [0], [0], [1], [0, 0, 1, 1], [], []>} : vector<2x1024xbf16>, vector<1024x32xbf16>, vector<2x32xf32> -> vector<2x32xf32>
    %c0_3 = arith.constant 0 : index
    %c0_4 = arith.constant 0 : index
    %4 = vector.load %arg3[%c0_3, %c0_4] : memref<1x32xf32, #tpu.memory_space<vmem>>, vector<1x32xf32>
    %5 = vector.broadcast %4 : vector<1x32xf32> to vector<2x32xf32>
    %6 = arith.addf %3, %5 : vector<2x32xf32>
    %7 = arith.mulf %6, %6 : vector<2x32xf32>
    %cst_5 = arith.constant dense<0.000000e+00> : vector<2xf32>
    %8 = vector.multi_reduction <add>, %7, %cst_5 [1] : vector<2x32xf32> to vector<2xf32>
    %9 = vector.shape_cast %8 : vector<2xf32> to vector<2x1xf32>
    %cst_6 = arith.constant 9.99999996E-13 : f32
    %10 = vector.broadcast %cst_6 : f32 to vector<2x1xf32>
    %11 = arith.maximumf %9, %10 : vector<2x1xf32>
    %12 = math.rsqrt %11 : vector<2x1xf32>
    %13 = vector.broadcast %12 : vector<2x1xf32> to vector<2x32xf32>
    %14 = arith.mulf %6, %13 : vector<2x32xf32>
    %c0_7 = arith.constant 0 : index
    %c0_8 = arith.constant 0 : index
    %15 = vector.load %arg4[%c0_7, %c0_8] : memref<32x32xf32, #tpu.memory_space<vmem>>, vector<32x32xf32>
    %cst_9 = arith.constant dense<0.000000e+00> : vector<2x32xf32>
    %16 = tpu.matmul %14, %15, %cst_9 {dimension_numbers = #tpu.dot_dimension_numbers<[1], [0], [0], [1], [0, 0, 1, 1], [], []>} : vector<2x32xf32>, vector<32x32xf32>, vector<2x32xf32> -> vector<2x32xf32>
    %c0_10 = arith.constant 0 : index
    %c0_11 = arith.constant 0 : index
    %17 = vector.load %arg5[%c0_10, %c0_11] : memref<1x32xf32, #tpu.memory_space<vmem>>, vector<1x32xf32>
    %18 = vector.broadcast %17 : vector<1x32xf32> to vector<2x32xf32>
    %19 = arith.addf %16, %18 : vector<2x32xf32>
    %20 = tpu.iota {dimensions = array<i32: 1>} : vector<2x32xi32>
    %c16_i32 = arith.constant 16 : i32
    %21 = vector.broadcast %c16_i32 : i32 to vector<2x32xi32>
    %22 = arith.cmpi sge, %20, %21 : vector<2x32xi32>
    %c0_12 = arith.constant 0 : index
    %c0_13 = arith.constant 0 : index
    %23 = vector.load %arg6[%c0_12, %c0_13] : memref<2x1xi32, #tpu.memory_space<vmem>>, vector<2x1xi32>
    %c16_i32_14 = arith.constant 16 : i32
    %24 = vector.broadcast %c16_i32_14 : i32 to vector<2x32xi32>
    %25 = arith.subi %20, %24 : vector<2x32xi32>
    %26 = vector.broadcast %23 : vector<2x1xi32> to vector<2x32xi32>
    %27 = arith.cmpi eq, %25, %26 : vector<2x32xi32>
    %28 = arith.andi %22, %27 : vector<2x32xi1>
    %cst_15 = arith.constant -1.000000e+00 : f32
    %cst_16 = arith.constant 1.000000e+00 : f32
    %29 = vector.broadcast %cst_15 : f32 to vector<2x32xf32>
    %30 = arith.maximumf %29, %19 : vector<2x32xf32>
    %31 = vector.broadcast %cst_16 : f32 to vector<2x32xf32>
    %32 = arith.minimumf %31, %30 : vector<2x32xf32>
    %33 = arith.mulf %32, %32 : vector<2x32xf32>
    %cst_17 = arith.constant 1.000000e+00 : f32
    %34 = vector.broadcast %cst_17 : f32 to vector<2x32xf32>
    %35 = arith.subf %34, %33 : vector<2x32xf32>
    %cst_18 = arith.constant 0.000000e+00 : f32
    %36 = vector.broadcast %cst_18 : f32 to vector<2x32xf32>
    %37 = arith.maximumf %35, %36 : vector<2x32xf32>
    %38 = math.sqrt %37 : vector<2x32xf32>
    %cst_19 = arith.constant 0.87758255 : f32
    %39 = vector.broadcast %cst_19 : f32 to vector<2x32xf32>
    %40 = arith.mulf %32, %39 : vector<2x32xf32>
    %cst_20 = arith.constant 0.47942555 : f32
    %41 = vector.broadcast %cst_20 : f32 to vector<2x32xf32>
    %42 = arith.mulf %38, %41 : vector<2x32xf32>
    %43 = arith.subf %40, %42 : vector<2x32xf32>
    %cst_21 = arith.constant -0.87758255 : f32
    %44 = vector.broadcast %cst_21 : f32 to vector<2x32xf32>
    %45 = arith.subf %32, %44 : vector<2x32xf32>
    %cst_22 = arith.constant 0.000000e+00 : f32
    %46 = vector.broadcast %cst_22 : f32 to vector<2x32xf32>
    %47 = arith.cmpf ole, %45, %46 : vector<2x32xf32>
    %cst_23 = arith.constant 0.239712775 : f32
    %48 = vector.broadcast %cst_23 : f32 to vector<2x32xf32>
    %49 = arith.subf %32, %48 : vector<2x32xf32>
    %50 = arith.select %47, %49, %43 : vector<2x32xi1>, vector<2x32xf32>
    %51 = arith.select %28, %50, %32 : vector<2x32xi1>, vector<2x32xf32>
    %52 = arith.select %22, %51, %19 : vector<2x32xi1>, vector<2x32xf32>
    %cst_24 = arith.constant 6.400000e+01 : f32
    %53 = vector.broadcast %cst_24 : f32 to vector<2x32xf32>
    %54 = arith.mulf %52, %53 : vector<2x32xf32>
    %55 = tpu.concatenate %6, %54 in 1 : vector<2x32xf32>, vector<2x32xf32> -> vector<2x64xf32>
    %c0_25 = arith.constant 0 : index
    %c0_26 = arith.constant 0 : index
    %56 = vector.load %arg7[%c0_25, %c0_26] : memref<2x64xf32, #tpu.memory_space<vmem>>, vector<2x64xf32>
    tpu.vector_store %arg7[%c0_25, %c0_26], %55 {strides = array<i32>} : memref<2x64xf32, #tpu.memory_space<vmem>>, vector<2x64xf32>,
    return
  }
  func.func @transform_0(%arg0: i32) -> (i32, i32) {
    %c0_i32 = arith.constant 0 : i32
    %c0_i32_0 = arith.constant 0 : i32
    return %arg0, %c0_i32 : i32, i32
  }
  func.func @transform_1(%arg0: i32) -> (i32, i32) {
    %c0_i32 = arith.constant 0 : i32
    %c0_i32_0 = arith.constant 0 : i32
    %c0_i32_1 = arith.constant 0 : i32
    return %c0_i32, %c0_i32_0 : i32, i32
  }
  func.func @transform_2(%arg0: i32) -> (i32, i32) {
    %c0_i32 = arith.constant 0 : i32
    %c0_i32_0 = arith.constant 0 : i32
    %c0_i32_1 = arith.constant 0 : i32
    return %c0_i32, %c0_i32_0 : i32, i32
  }
  func.func @transform_3(%arg0: i32) -> (i32, i32) {
    %c0_i32 = arith.constant 0 : i32
    %c0_i32_0 = arith.constant 0 : i32
    %c0_i32_1 = arith.constant 0 : i32
    return %c0_i32, %c0_i32_0 : i32, i32
  }
  func.func @transform_4(%arg0: i32) -> (i32, i32) {
    %c0_i32 = arith.constant 0 : i32
    %c0_i32_0 = arith.constant 0 : i32
    %c0_i32_1 = arith.constant 0 : i32
    return %c0_i32, %c0_i32_0 : i32, i32
  }
  func.func @transform_5(%arg0: i32) -> (i32, i32) {
    %c0_i32 = arith.constant 0 : i32
    %c0_i32_0 = arith.constant 0 : i32
    return %arg0, %c0_i32 : i32, i32
  }
  func.func @transform_6(%arg0: i32) -> (i32, i32) {
    %c0_i32 = arith.constant 0 : i32
    %c0_i32_0 = arith.constant 0 : i32
    return %arg0, %c0_i32 : i32, i32
  }
}

</mosaic_0001>

<llo_original>
// kernel: tpu_custom_call.1
$region0: #{tpu_custom_call.1}
  #allocation0 [shape = 'u32[]', space=smem, size = 0x4, offset = 0x4, fixed_abs, tag = 'smem constant byte address 0x4 - core index']
  #allocation1 [shape = 'u32[144,128]{1,0:T(1,128)}', space=vmem, size = 0x12000, scoped, tag = 'internal scratch']
  %s0 = inlined_call_operand.vmem [shape: f32[2,1024], index: 0, kind: input, shape index: {}]
  %s1 = inlined_call_operand.vmem [shape: bf16[1024,32], index: 1, kind: input, shape index: {}]
  %s2 = inlined_call_operand.vmem [shape: f32[1,32], index: 2, kind: input, shape index: {}]
  %s3 = inlined_call_operand.vmem [shape: f32[32,32], index: 3, kind: input, shape index: {}]
  %s4 = inlined_call_operand.vmem [shape: f32[1,32], index: 4, kind: input, shape index: {}]
  %s5 = inlined_call_operand.vmem [shape: s32[2,1], index: 5, kind: input, shape index: {}]
  %s6 = inlined_call_operand.hbm [shape: f32[2,64], index: 6, kind: output, shape index: {}]
  %s7 = sld [smem:[#allocation0]]
  $region34: #{tpu_custom_call.1} parent=0
    _
  %s9 = ssub.s32 1, %s7
  %s10 = scalar_select 0, %s9, %s7
  $region1: #{tpu_custom_call.1} parent=0
    #allocation2 [shape = 'u8[1024]{0}', space=vmem, size = 0x400, scoped, tag = 'output window, operand 0, single buffered']
    #allocation3 [shape = 's32[1]{0}', space=sflag, size = 0x4, scoped, tag = 'scoped memory for tpu_custom_call.1']
    %11 = vsyncpa [#allocation3], 0
    // Predicated region
    $region2: #{tpu_custom_call.1} parent=1 // pred_check
      _
    $region3: #{tpu_custom_call.1} parent=1 // pred_check_branch
      %13 = sbr.rel (0) target = $region5
    $region4: #{tpu_custom_call.1} parent=1 // pred_region
      _
    $region5: #{tpu_custom_call.1} parent=1 // pred_fallthru
      _
    // Predicated region
    $region6: #{tpu_custom_call.1} parent=1 // pred_check
      _
    $region7: #{tpu_custom_call.1} parent=1 // pred_check_branch
      %15 = sbr.rel (0) target = $region9
    $region8: #{tpu_custom_call.1} parent=1 // pred_region
      _
    $region9: #{tpu_custom_call.1} parent=1 // pred_fallthru
      _
    // Predicated region
    $region10: #{tpu_custom_call.1} parent=1 // pred_check
      _
    $region11: #{tpu_custom_call.1} parent=1 // pred_check_branch
      %17 = sbr.rel (0) target = $region13
    $region12: #{tpu_custom_call.1} parent=1 // pred_region
      _
    $region13: #{tpu_custom_call.1} parent=1 // pred_fallthru
      _
    // Predicated region
    $region14: #{tpu_custom_call.1} parent=1 // pred_check
      _
    $region15: #{tpu_custom_call.1} parent=1 // pred_check_branch
      %19 = sbr.rel (0) target = $region17
    $region16: #{tpu_custom_call.1} parent=1 // pred_region
      _
    $region17: #{tpu_custom_call.1} parent=1 // pred_fallthru
      _
    // Predicated region
    $region18: #{tpu_custom_call.1} parent=1 // pred_check
      _
    $region19: #{tpu_custom_call.1} parent=1 // pred_check_branch
      %21 = sbr.rel (0) target = $region21
    $region20: #{tpu_custom_call.1} parent=1 // pred_region
      _
    $region21: #{tpu_custom_call.1} parent=1 // pred_fallthru
      _
    // Predicated region
    $region22: #{tpu_custom_call.1} parent=1 // pred_check
      _
    $region23: #{tpu_custom_call.1} parent=1 // pred_check_branch
      %23 = sbr.rel (0) target = $region25
    $region24: #{tpu_custom_call.1} parent=1 // pred_region
      _
    $region25: #{tpu_custom_call.1} parent=1 // pred_fallthru
      _
    %v25 = vld [vmem:[%s0] sm:$0xff]
    %v26 = vld [vmem:[%s0 + $0x8] sm:$0xff]
    %v29 = vcombine.high %v25, %v25
    %v31 = vunpack.c.l.s4 1983009808
    %v32 = vunpack.c.0.s8 %v31
    %v33 = vlaneseq
    %v34 = vshrl.u32 %v33, 7
    %v35 = vsub.s32 %v32, %v34
    %v36 = vrot.slane %v25, %v35
    %v38 = vunpack.c.l.s4 1983009808
    %v39 = vunpack.c.0.s8 %v38
    %v40 = vlaneseq
    %v41 = vshrl.u32 %v40, 7
    %v42 = vsub.s32 %v39, %v41
    %v43 = vrot.slane %v29, %v42
    %v44 = vcombine.high %v36, %v36
    %v45 = vcombine.high %v43, %v43
    %v46 = vcombine.high %v26, %v26
    %v48 = vunpack.c.l.s4 1983009808
    %v49 = vunpack.c.0.s8 %v48
    %v50 = vlaneseq
    %v51 = vshrl.u32 %v50, 7
    %v52 = vsub.s32 %v49, %v51
    %v53 = vrot.slane %v26, %v52
    %v55 = vunpack.c.l.s4 1983009808
    %v56 = vunpack.c.0.s8 %v55
    %v57 = vlaneseq
    %v58 = vshrl.u32 %v57, 7
    %v59 = vsub.s32 %v56, %v58
    %v60 = vrot.slane %v46, %v59
    %v61 = vcombine.high %v53, %v53
    %v62 = vcombine.high %v60, %v60
    %v71 = vpack.c.bf16 %v36, %v36
    %v72 = vpack.c.bf16 %v44, %v44
    %v73 = vpack.c.bf16 %v43, %v43
    %v74 = vpack.c.bf16 %v45, %v45
    %v75 = vpack.c.bf16 %v53, %v53
    %v76 = vpack.c.bf16 %v61, %v61
    %v77 = vpack.c.bf16 %v60, %v60
    %v78 = vpack.c.bf16 %v62, %v62
    %v79 = vld [vmem:[%s1] sm:$0xf]
    %v80 = vld [vmem:[%s1 + $0x4] sm:$0xf]
    %v81 = vld [vmem:[%s1 + $0x8] sm:$0xf]
    %v82 = vld [vmem:[%s1 + $0xc] sm:$0xf]
    %v83 = vld [vmem:[%s1 + $0x10] sm:$0xf]
    %v84 = vld [vmem:[%s1 + $0x14] sm:$0xf]
    %v85 = vld [vmem:[%s1 + $0x18] sm:$0xf]
    %v86 = vld [vmem:[%s1 + $0x1c] sm:$0xf]
    %v87 = vld [vmem:[%s1 + $0x20] sm:$0xf]
    %v88 = vld [vmem:[%s1 + $0x24] sm:$0xf]
    %v89 = vld [vmem:[%s1 + $0x28] sm:$0xf]
    %v90 = vld [vmem:[%s1 + $0x2c] sm:$0xf]
    %v91 = vld [vmem:[%s1 + $0x30] sm:$0xf]
    %v92 = vld [vmem:[%s1 + $0x34] sm:$0xf]
    %v93 = vld [vmem:[%s1 + $0x38] sm:$0xf]
    %v94 = vld [vmem:[%s1 + $0x3c] sm:$0xf]
    %v95 = vld [vmem:[%s1 + $0x40] sm:$0xf]
    %v96 = vld [vmem:[%s1 + $0x44] sm:$0xf]
    %v97 = vld [vmem:[%s1 + $0x48] sm:$0xf]
    %v98 = vld [vmem:[%s1 + $0x4c] sm:$0xf]
    %v99 = vld [vmem:[%s1 + $0x50] sm:$0xf]
    %v100 = vld [vmem:[%s1 + $0x54] sm:$0xf]
    %v101 = vld [vmem:[%s1 + $0x58] sm:$0xf]
    %v102 = vld [vmem:[%s1 + $0x5c] sm:$0xf]
    %v103 = vld [vmem:[%s1 + $0x60] sm:$0xf]
    %v104 = vld [vmem:[%s1 + $0x64] sm:$0xf]
    %v105 = vld [vmem:[%s1 + $0x68] sm:$0xf]
    %v106 = vld [vmem:[%s1 + $0x6c] sm:$0xf]
    %v107 = vld [vmem:[%s1 + $0x70] sm:$0xf]
    %v108 = vld [vmem:[%s1 + $0x74] sm:$0xf]
    %v109 = vld [vmem:[%s1 + $0x78] sm:$0xf]
    %v110 = vld [vmem:[%s1 + $0x7c] sm:$0xf]
    %v111 = vld [vmem:[%s1 + $0x80] sm:$0xf]
    %v112 = vld [vmem:[%s1 + $0x84] sm:$0xf]
    %v113 = vld [vmem:[%s1 + $0x88] sm:$0xf]
    %v114 = vld [vmem:[%s1 + $0x8c] sm:$0xf]
    %v115 = vld [vmem:[%s1 + $0x90] sm:$0xf]
    %v116 = vld [vmem:[%s1 + $0x94] sm:$0xf]
    %v117 = vld [vmem:[%s1 + $0x98] sm:$0xf]
    %v118 = vld [vmem:[%s1 + $0x9c] sm:$0xf]
    %v119 = vld [vmem:[%s1 + $0xa0] sm:$0xf]
    %v120 = vld [vmem:[%s1 + $0xa4] sm:$0xf]
    %v121 = vld [vmem:[%s1 + $0xa8] sm:$0xf]
    %v122 = vld [vmem:[%s1 + $0xac] sm:$0xf]
    %v123 = vld [vmem:[%s1 + $0xb0] sm:$0xf]
    %v124 = vld [vmem:[%s1 + $0xb4] sm:$0xf]
    %v125 = vld [vmem:[%s1 + $0xb8] sm:$0xf]
    %v126 = vld [vmem:[%s1 + $0xbc] sm:$0xf]
    %v127 = vld [vmem:[%s1 + $0xc0] sm:$0xf]
    %v128 = vld [vmem:[%s1 + $0xc4] sm:$0xf]
    %v129 = vld [vmem:[%s1 + $0xc8] sm:$0xf]
    %v130 = vld [vmem:[%s1 + $0xcc] sm:$0xf]
    %v131 = vld [vmem:[%s1 + $0xd0] sm:$0xf]
    %v132 = vld [vmem:[%s1 + $0xd4] sm:$0xf]
    %v133 = vld [vmem:[%s1 + $0xd8] sm:$0xf]
    %v134 = vld [vmem:[%s1 + $0xdc] sm:$0xf]
    %v135 = vld [vmem:[%s1 + $0xe0] sm:$0xf]
    %v136 = vld [vmem:[%s1 + $0xe4] sm:$0xf]
    %v137 = vld [vmem:[%s1 + $0xe8] sm:$0xf]
    %v138 = vld [vmem:[%s1 + $0xec] sm:$0xf]
    %v139 = vld [vmem:[%s1 + $0xf0] sm:$0xf]
    %v140 = vld [vmem:[%s1 + $0xf4] sm:$0xf]
    %v141 = vld [vmem:[%s1 + $0xf8] sm:$0xf]
    %v142 = vld [vmem:[%s1 + $0xfc] sm:$0xf]
    %v143 = vld [vmem:[%s1 + $0x100] sm:$0xf]
    %v144 = vld [vmem:[%s1 + $0x104] sm:$0xf]
    %v145 = vld [vmem:[%s1 + $0x108] sm:$0xf]
    %v146 = vld [vmem:[%s1 + $0x10c] sm:$0xf]
    %v147 = vld [vmem:[%s1 + $0x110] sm:$0xf]
    %v148 = vld [vmem:[%s1 + $0x114] sm:$0xf]
    %v149 = vld [vmem:[%s1 + $0x118] sm:$0xf]
    %v150 = vld [vmem:[%s1 + $0x11c] sm:$0xf]
    %v151 = vld [vmem:[%s1 + $0x120] sm:$0xf]
    %v152 = vld [vmem:[%s1 + $0x124] sm:$0xf]
    %v153 = vld [vmem:[%s1 + $0x128] sm:$0xf]
    %v154 = vld [vmem:[%s1 + $0x12c] sm:$0xf]
    %v155 = vld [vmem:[%s1 + $0x130] sm:$0xf]
    %v156 = vld [vmem:[%s1 + $0x134] sm:$0xf]
    %v157 = vld [vmem:[%s1 + $0x138] sm:$0xf]
    %v158 = vld [vmem:[%s1 + $0x13c] sm:$0xf]
    %v159 = vld [vmem:[%s1 + $0x140] sm:$0xf]
    %v160 = vld [vmem:[%s1 + $0x144] sm:$0xf]
    %v161 = vld [vmem:[%s1 + $0x148] sm:$0xf]
    %v162 = vld [vmem:[%s1 + $0x14c] sm:$0xf]
    %v163 = vld [vmem:[%s1 + $0x150] sm:$0xf]
    %v164 = vld [vmem:[%s1 + $0x154] sm:$0xf]
    %v165 = vld [vmem:[%s1 + $0x158] sm:$0xf]
    %v166 = vld [vmem:[%s1 + $0x15c] sm:$0xf]
    %v167 = vld [vmem:[%s1 + $0x160] sm:$0xf]
    %v168 = vld [vmem:[%s1 + $0x164] sm:$0xf]
    %v169 = vld [vmem:[%s1 + $0x168] sm:$0xf]
    %v170 = vld [vmem:[%s1 + $0x16c] sm:$0xf]
    %v171 = vld [vmem:[%s1 + $0x170] sm:$0xf]
    %v172 = vld [vmem:[%s1 + $0x174] sm:$0xf]
    %v173 = vld [vmem:[%s1 + $0x178] sm:$0xf]
    %v174 = vld [vmem:[%s1 + $0x17c] sm:$0xf]
    %v175 = vld [vmem:[%s1 + $0x180] sm:$0xf]
    %v176 = vld [vmem:[%s1 + $0x184] sm:$0xf]
    %v177 = vld [vmem:[%s1 + $0x188] sm:$0xf]
    %v178 = vld [vmem:[%s1 + $0x18c] sm:$0xf]
    %v179 = vld [vmem:[%s1 + $0x190] sm:$0xf]
    %v180 = vld [vmem:[%s1 + $0x194] sm:$0xf]
    %v181 = vld [vmem:[%s1 + $0x198] sm:$0xf]
    %v182 = vld [vmem:[%s1 + $0x19c] sm:$0xf]
    %v183 = vld [vmem:[%s1 + $0x1a0] sm:$0xf]
    %v184 = vld [vmem:[%s1 + $0x1a4] sm:$0xf]
    %v185 = vld [vmem:[%s1 + $0x1a8] sm:$0xf]
    %v186 = vld [vmem:[%s1 + $0x1ac] sm:$0xf]
    %v187 = vld [vmem:[%s1 + $0x1b0] sm:$0xf]
    %v188 = vld [vmem:[%s1 + $0x1b4] sm:$0xf]
    %v189 = vld [vmem:[%s1 + $0x1b8] sm:$0xf]
    %v190 = vld [vmem:[%s1 + $0x1bc] sm:$0xf]
    %v191 = vld [vmem:[%s1 + $0x1c0] sm:$0xf]
    %v192 = vld [vmem:[%s1 + $0x1c4] sm:$0xf]
    %v193 = vld [vmem:[%s1 + $0x1c8] sm:$0xf]
    %v194 = vld [vmem:[%s1 + $0x1cc] sm:$0xf]
    %v195 = vld [vmem:[%s1 + $0x1d0] sm:$0xf]
    %v196 = vld [vmem:[%s1 + $0x1d4] sm:$0xf]
    %v197 = vld [vmem:[%s1 + $0x1d8] sm:$0xf]
    %v198 = vld [vmem:[%s1 + $0x1dc] sm:$0xf]
    %v199 = vld [vmem:[%s1 + $0x1e0] sm:$0xf]
    %v200 = vld [vmem:[%s1 + $0x1e4] sm:$0xf]
    %v201 = vld [vmem:[%s1 + $0x1e8] sm:$0xf]
    %v202 = vld [vmem:[%s1 + $0x1ec] sm:$0xf]
    %v203 = vld [vmem:[%s1 + $0x1f0] sm:$0xf]
    %v204 = vld [vmem:[%s1 + $0x1f4] sm:$0xf]
    %v205 = vld [vmem:[%s1 + $0x1f8] sm:$0xf]
    %v206 = vld [vmem:[%s1 + $0x1fc] sm:$0xf]
    %v207 = vld [vmem:[%s2] sm:$0x1]
    %v209 = vlaneseq
    %v210 = vshrl.u32 %v209, 7
    %v211 = vsub.s32 0, %v210
    %v212 = vrot.slane %v207, %v211
    %v342 = vunpack.c.l.b16 %v79
    %v343 = vunpack.c.l.b16 %v80
    %v344 = vunpack.c.l.b16 %v81
    %v345 = vunpack.c.l.b16 %v82
    %v346 = vunpack.c.l.b16 %v83
    %v347 = vunpack.c.l.b16 %v84
    %v348 = vunpack.c.l.b16 %v85
    %v349 = vunpack.c.l.b16 %v86
    %v350 = vunpack.c.l.b16 %v87
    %v351 = vunpack.c.l.b16 %v88
    %v352 = vunpack.c.l.b16 %v89
    %v353 = vunpack.c.l.b16 %v90
    %v354 = vunpack.c.l.b16 %v91
    %v355 = vunpack.c.l.b16 %v92
    %v356 = vunpack.c.l.b16 %v93
    %v357 = vunpack.c.l.b16 %v94
    %v358 = vunpack.c.l.b16 %v95
    %v359 = vunpack.c.l.b16 %v96
    %v360 = vunpack.c.l.b16 %v97
    %v361 = vunpack.c.l.b16 %v98
    %v362 = vunpack.c.l.b16 %v99
    %v363 = vunpack.c.l.b16 %v100
    %v364 = vunpack.c.l.b16 %v101
    %v365 = vunpack.c.l.b16 %v102
    %v366 = vunpack.c.l.b16 %v103
    %v367 = vunpack.c.l.b16 %v104
    %v368 = vunpack.c.l.b16 %v105
    %v369 = vunpack.c.l.b16 %v106
    %v370 = vunpack.c.l.b16 %v107
    %v371 = vunpack.c.l.b16 %v108
    %v372 = vunpack.c.l.b16 %v109
    %v373 = vunpack.c.l.b16 %v110
    %v374 = vunpack.c.l.b16 %v111
    %v375 = vunpack.c.l.b16 %v112
    %v376 = vunpack.c.l.b16 %v113
    %v377 = vunpack.c.l.b16 %v114
    %v378 = vunpack.c.l.b16 %v115
    %v379 = vunpack.c.l.b16 %v116
    %v380 = vunpack.c.l.b16 %v117
    %v381 = vunpack.c.l.b16 %v118
    %v382 = vunpack.c.l.b16 %v119
    %v383 = vunpack.c.l.b16 %v120
    %v384 = vunpack.c.l.b16 %v121
    %v385 = vunpack.c.l.b16 %v122
    %v386 = vunpack.c.l.b16 %v123
    %v387 = vunpack.c.l.b16 %v124
    %v388 = vunpack.c.l.b16 %v125
    %v389 = vunpack.c.l.b16 %v126
    %v390 = vunpack.c.l.b16 %v127
    %v391 = vunpack.c.l.b16 %v128
    %v392 = vunpack.c.l.b16 %v129
    %v393 = vunpack.c.l.b16 %v130
    %v394 = vunpack.c.l.b16 %v131
    %v395 = vunpack.c.l.b16 %v132
    %v396 = vunpack.c.l.b16 %v133
    %v397 = vunpack.c.l.b16 %v134
    %v398 = vunpack.c.l.b16 %v135
    %v399 = vunpack.c.l.b16 %v136
    %v400 = vunpack.c.l.b16 %v137
    %v401 = vunpack.c.l.b16 %v138
    %v402 = vunpack.c.l.b16 %v139
    %v403 = vunpack.c.l.b16 %v140
    %v404 = vunpack.c.l.b16 %v141
    %v405 = vunpack.c.l.b16 %v142
    %v406 = vunpack.c.l.b16 %v143
    %v407 = vunpack.c.l.b16 %v144
    %v408 = vunpack.c.l.b16 %v145
    %v409 = vunpack.c.l.b16 %v146
    %v410 = vunpack.c.l.b16 %v147
    %v411 = vunpack.c.l.b16 %v148
    %v412 = vunpack.c.l.b16 %v149
    %v413 = vunpack.c.l.b16 %v150
    %v414 = vunpack.c.l.b16 %v151
    %v415 = vunpack.c.l.b16 %v152
    %v416 = vunpack.c.l.b16 %v153
    %v417 = vunpack.c.l.b16 %v154
    %v418 = vunpack.c.l.b16 %v155
    %v419 = vunpack.c.l.b16 %v156
    %v420 = vunpack.c.l.b16 %v157
    %v421 = vunpack.c.l.b16 %v158
    %v422 = vunpack.c.l.b16 %v159
    %v423 = vunpack.c.l.b16 %v160
    %v424 = vunpack.c.l.b16 %v161
    %v425 = vunpack.c.l.b16 %v162
    %v426 = vunpack.c.l.b16 %v163
    %v427 = vunpack.c.l.b16 %v164
    %v428 = vunpack.c.l.b16 %v165
    %v429 = vunpack.c.l.b16 %v166
    %v430 = vunpack.c.l.b16 %v167
    %v431 = vunpack.c.l.b16 %v168
    %v432 = vunpack.c.l.b16 %v169
    %v433 = vunpack.c.l.b16 %v170
    %v434 = vunpack.c.l.b16 %v171
    %v435 = vunpack.c.l.b16 %v172
    %v436 = vunpack.c.l.b16 %v173
    %v437 = vunpack.c.l.b16 %v174
    %v438 = vunpack.c.l.b16 %v175
    %v439 = vunpack.c.l.b16 %v176
    %v440 = vunpack.c.l.b16 %v177
    %v441 = vunpack.c.l.b16 %v178
    %v442 = vunpack.c.l.b16 %v179
    %v443 = vunpack.c.l.b16 %v180
    %v444 = vunpack.c.l.b16 %v181
    %v445 = vunpack.c.l.b16 %v182
    %v446 = vunpack.c.l.b16 %v183
    %v447 = vunpack.c.l.b16 %v184
    %v448 = vunpack.c.l.b16 %v185
    %v449 = vunpack.c.l.b16 %v186
    %v450 = vunpack.c.l.b16 %v187
    %v451 = vunpack.c.l.b16 %v188
    %v452 = vunpack.c.l.b16 %v189
    %v453 = vunpack.c.l.b16 %v190
    %v454 = vunpack.c.l.b16 %v191
    %v455 = vunpack.c.l.b16 %v192
    %v456 = vunpack.c.l.b16 %v193
    %v457 = vunpack.c.l.b16 %v194
    %v458 = vunpack.c.l.b16 %v195
    %v459 = vunpack.c.l.b16 %v196
    %v460 = vunpack.c.l.b16 %v197
    %v461 = vunpack.c.l.b16 %v198
    %v462 = vunpack.c.l.b16 %v199
    %v463 = vunpack.c.l.b16 %v200
    %v464 = vunpack.c.l.b16 %v201
    %v465 = vunpack.c.l.b16 %v202
    %v466 = vunpack.c.l.b16 %v203
    %v467 = vunpack.c.l.b16 %v204
    %v468 = vunpack.c.l.b16 %v205
    %v469 = vunpack.c.l.b16 %v206
    %v470 = vpack.c.b16 %v343, %v342
    %v471 = vpack.c.b16 %v345, %v344
    %v472 = vpack.c.b16 %v347, %v346
    %v473 = vpack.c.b16 %v349, %v348
    %v474 = vpack.c.b16 %v351, %v350
    %v475 = vpack.c.b16 %v353, %v352
    %v476 = vpack.c.b16 %v355, %v354
    %v477 = vpack.c.b16 %v357, %v356
    %v478 = vpack.c.b16 %v359, %v358
    %v479 = vpack.c.b16 %v361, %v360
    %v480 = vpack.c.b16 %v363, %v362
    %v481 = vpack.c.b16 %v365, %v364
    %v482 = vpack.c.b16 %v367, %v366
    %v483 = vpack.c.b16 %v369, %v368
    %v484 = vpack.c.b16 %v371, %v370
    %v485 = vpack.c.b16 %v373, %v372
    %v486 = vpack.c.b16 %v375, %v374
    %v487 = vpack.c.b16 %v377, %v376
    %v488 = vpack.c.b16 %v379, %v378
    %v489 = vpack.c.b16 %v381, %v380
    %v490 = vpack.c.b16 %v383, %v382
    %v491 = vpack.c.b16 %v385, %v384
    %v492 = vpack.c.b16 %v387, %v386
    %v493 = vpack.c.b16 %v389, %v388
    %v494 = vpack.c.b16 %v391, %v390
    %v495 = vpack.c.b16 %v393, %v392
    %v496 = vpack.c.b16 %v395, %v394
    %v497 = vpack.c.b16 %v397, %v396
    %v498 = vpack.c.b16 %v399, %v398
    %v499 = vpack.c.b16 %v401, %v400
    %v500 = vpack.c.b16 %v403, %v402
    %v501 = vpack.c.b16 %v405, %v404
    %v502 = vpack.c.b16 %v407, %v406
    %v503 = vpack.c.b16 %v409, %v408
    %v504 = vpack.c.b16 %v411, %v410
    %v505 = vpack.c.b16 %v413, %v412
    %v506 = vpack.c.b16 %v415, %v414
    %v507 = vpack.c.b16 %v417, %v416
    %v508 = vpack.c.b16 %v419, %v418
    %v509 = vpack.c.b16 %v421, %v420
    %v510 = vpack.c.b16 %v423, %v422
    %v511 = vpack.c.b16 %v425, %v424
    %v512 = vpack.c.b16 %v427, %v426
    %v513 = vpack.c.b16 %v429, %v428
    %v514 = vpack.c.b16 %v431, %v430
    %v515 = vpack.c.b16 %v433, %v432
    %v516 = vpack.c.b16 %v435, %v434
    %v517 = vpack.c.b16 %v437, %v436
    %v518 = vpack.c.b16 %v439, %v438
    %v519 = vpack.c.b16 %v441, %v440
    %v520 = vpack.c.b16 %v443, %v442
    %v521 = vpack.c.b16 %v445, %v444
    %v522 = vpack.c.b16 %v447, %v446
    %v523 = vpack.c.b16 %v449, %v448
    %v524 = vpack.c.b16 %v451, %v450
    %v525 = vpack.c.b16 %v453, %v452
    %v526 = vpack.c.b16 %v455, %v454
    %v527 = vpack.c.b16 %v457, %v456
    %v528 = vpack.c.b16 %v459, %v458
    %v529 = vpack.c.b16 %v461, %v460
    %v530 = vpack.c.b16 %v463, %v462
    %v531 = vpack.c.b16 %v465, %v464
    %v532 = vpack.c.b16 %v467, %v466
    %v533 = vpack.c.b16 %v469, %v468
    %598 = vmatprep.subr.bf16.mxu0 0
    %599 = vmatpush1.bf16.msra.mxu0 %v477
    %600 = vmatprep.subr.bf16.mxu0 0
    %601 = vmatpush1.bf16.msra.mxu0 %v476
    %602 = vmatprep.subr.bf16.mxu0 0
    %603 = vmatpush1.bf16.msra.mxu0 %v475
    %604 = vmatprep.subr.bf16.mxu0 0
    %605 = vmatpush1.bf16.msra.mxu0 %v474
    %606 = vmatprep.subr.bf16.mxu0 0
    %607 = vmatpush1.bf16.msra.mxu0 %v473
    %608 = vmatprep.subr.bf16.mxu0 0
    %609 = vmatpush1.bf16.msra.mxu0 %v472
    %610 = vmatprep.subr.bf16.mxu0 0
    %611 = vmatpush1.bf16.msra.mxu0 %v471
    %612 = vmatprep.subr.bf16.mxu0 0
    %613 = vmatpush1.bf16.msra.mxu0 %v470
    %614 = vmatprep.subr.bf16.mxu0 0
    %615 = vmatpush2.bf16.msra.mxu0 %v485
    %616 = vmatprep.subr.bf16.mxu0 0
    %617 = vmatpush2.bf16.msra.mxu0 %v484
    %618 = vmatprep.subr.bf16.mxu0 0
    %619 = vmatpush2.bf16.msra.mxu0 %v483
    %620 = vmatprep.subr.bf16.mxu0 0
    %621 = vmatpush2.bf16.msra.mxu0 %v482
    %622 = vmatprep.subr.bf16.mxu0 0
    %623 = vmatpush2.bf16.msra.mxu0 %v481
    %624 = vmatprep.subr.bf16.mxu0 0
    %625 = vmatpush2.bf16.msra.mxu0 %v480
    %626 = vmatprep.subr.bf16.mxu0 0
    %627 = vmatpush2.bf16.msra.mxu0 %v479
    %628 = vmatprep.subr.bf16.mxu0 0
    %629 = vmatpush2.bf16.msra.mxu0 %v478
    %630 = vmatprep.mubr.bf16.mxu0 %v72
    %631 = vmatmul.mubr.bf16.gmra.mxu0 %v71
    %v632 = vpop.f32.mrf.mxu0
    %v633 = vadd.f32 %v212, %v632
    %v634 = vpop.f32.mrf.mxu0
    %v635 = vpop.f32.mrf.mxu0
    %v636 = vpop.f32.mrf.mxu0
    %637 = vdwg.mxu0
    %638 = vmatprep.subr.bf16.mxu0 0
    %639 = vmatpush1.bf16.msra.mxu0 %v493
    %640 = vmatprep.subr.bf16.mxu0 0
    %641 = vmatpush1.bf16.msra.mxu0 %v492
    %642 = vmatprep.subr.bf16.mxu0 0
    %643 = vmatpush1.bf16.msra.mxu0 %v491
    %644 = vmatprep.subr.bf16.mxu0 0
    %645 = vmatpush1.bf16.msra.mxu0 %v490
    %646 = vmatprep.subr.bf16.mxu0 0
    %647 = vmatpush1.bf16.msra.mxu0 %v489
    %648 = vmatprep.subr.bf16.mxu0 0
    %649 = vmatpush1.bf16.msra.mxu0 %v488
    %650 = vmatprep.subr.bf16.mxu0 0
    %651 = vmatpush1.bf16.msra.mxu0 %v487
    %652 = vmatprep.subr.bf16.mxu0 0
    %653 = vmatpush1.bf16.msra.mxu0 %v486
    %654 = vmatprep.subr.bf16.mxu0 0
    %655 = vmatpush2.bf16.msra.mxu0 %v501
    %656 = vmatprep.subr.bf16.mxu0 0
    %657 = vmatpush2.bf16.msra.mxu0 %v500
    %658 = vmatprep.subr.bf16.mxu0 0
    %659 = vmatpush2.bf16.msra.mxu0 %v499
    %660 = vmatprep.subr.bf16.mxu0 0
    %661 = vmatpush2.bf16.msra.mxu0 %v498
    %662 = vmatprep.subr.bf16.mxu0 0
    %663 = vmatpush2.bf16.msra.mxu0 %v497
    %664 = vmatprep.subr.bf16.mxu0 0
    %665 = vmatpush2.bf16.msra.mxu0 %v496
    %666 = vmatprep.subr.bf16.mxu0 0
    %667 = vmatpush2.bf16.msra.mxu0 %v495
    %668 = vmatprep.subr.bf16.mxu0 0
    %669 = vmatpush2.bf16.msra.mxu0 %v494
    %670 = vmatprep.mubr.bf16.mxu0 %v74
    %671 = vmatmul.mubr.bf16.gmra.mxu0 %v73
    %v672 = vpop.f32.mrf.mxu0
    %v673 = vadd.f32 %v633, %v672
    %v674 = vpop.f32.mrf.mxu0
    %v675 = vpop.f32.mrf.mxu0
    %v676 = vpop.f32.mrf.mxu0
    %677 = vdwg.mxu0
    %678 = vmatprep.subr.bf16.mxu0 0
    %679 = vmatpush1.bf16.msra.mxu0 %v509
    %680 = vmatprep.subr.bf16.mxu0 0
    %681 = vmatpush1.bf16.msra.mxu0 %v508
    %682 = vmatprep.subr.bf16.mxu0 0
    %683 = vmatpush1.bf16.msra.mxu0 %v507
    %684 = vmatprep.subr.bf16.mxu0 0
    %685 = vmatpush1.bf16.msra.mxu0 %v506
    %686 = vmatprep.subr.bf16.mxu0 0
    %687 = vmatpush1.bf16.msra.mxu0 %v505
    %688 = vmatprep.subr.bf16.mxu0 0
    %689 = vmatpush1.bf16.msra.mxu0 %v504
    %690 = vmatprep.subr.bf16.mxu0 0
    %691 = vmatpush1.bf16.msra.mxu0 %v503
    %692 = vmatprep.subr.bf16.mxu0 0
    %693 = vmatpush1.bf16.msra.mxu0 %v502
    %694 = vmatprep.subr.bf16.mxu0 0
    %695 = vmatpush2.bf16.msra.mxu0 %v517
    %696 = vmatprep.subr.bf16.mxu0 0
    %697 = vmatpush2.bf16.msra.mxu0 %v516
    %698 = vmatprep.subr.bf16.mxu0 0
    %699 = vmatpush2.bf16.msra.mxu0 %v515
    %700 = vmatprep.subr.bf16.mxu0 0
    %701 = vmatpush2.bf16.msra.mxu0 %v514
    %702 = vmatprep.subr.bf16.mxu0 0
    %703 = vmatpush2.bf16.msra.mxu0 %v513
    %704 = vmatprep.subr.bf16.mxu0 0
    %705 = vmatpush2.bf16.msra.mxu0 %v512
    %706 = vmatprep.subr.bf16.mxu0 0
    %707 = vmatpush2.bf16.msra.mxu0 %v511
    %708 = vmatprep.subr.bf16.mxu0 0
    %709 = vmatpush2.bf16.msra.mxu0 %v510
    %710 = vmatprep.mubr.bf16.mxu0 %v76
    %711 = vmatmul.mubr.bf16.gmra.mxu0 %v75
    %v712 = vpop.f32.mrf.mxu0
    %v713 = vadd.f32 %v673, %v712
    %v714 = vpop.f32.mrf.mxu0
    %v715 = vpop.f32.mrf.mxu0
    %v716 = vpop.f32.mrf.mxu0
    %717 = vdwg.mxu0
    %718 = vmatprep.subr.bf16.mxu0 0
    %719 = vmatpush1.bf16.msra.mxu0 %v525
    %720 = vmatprep.subr.bf16.mxu0 0
    %721 = vmatpush1.bf16.msra.mxu0 %v524
    %722 = vmatprep.subr.bf16.mxu0 0
    %723 = vmatpush1.bf16.msra.mxu0 %v523
    %724 = vmatprep.subr.bf16.mxu0 0
    %725 = vmatpush1.bf16.msra.mxu0 %v522
    %726 = vmatprep.subr.bf16.mxu0 0
    %727 = vmatpush1.bf16.msra.mxu0 %v521
    %728 = vmatprep.subr.bf16.mxu0 0
    %729 = vmatpush1.bf16.msra.mxu0 %v520
    %730 = vmatprep.subr.bf16.mxu0 0
    %731 = vmatpush1.bf16.msra.mxu0 %v519
    %732 = vmatprep.subr.bf16.mxu0 0
    %733 = vmatpush1.bf16.msra.mxu0 %v518
    %734 = vmatprep.subr.bf16.mxu0 0
    %735 = vmatpush2.bf16.msra.mxu0 %v533
    %736 = vmatprep.subr.bf16.mxu0 0
    %737 = vmatpush2.bf16.msra.mxu0 %v532
    %738 = vmatprep.subr.bf16.mxu0 0
    %739 = vmatpush2.bf16.msra.mxu0 %v531
    %740 = vmatprep.subr.bf16.mxu0 0
    %741 = vmatpush2.bf16.msra.mxu0 %v530
    %742 = vmatprep.subr.bf16.mxu0 0
    %743 = vmatpush2.bf16.msra.mxu0 %v529
    %744 = vmatprep.subr.bf16.mxu0 0
    %745 = vmatpush2.bf16.msra.mxu0 %v528
    %746 = vmatprep.subr.bf16.mxu0 0
    %747 = vmatpush2.bf16.msra.mxu0 %v527
    %748 = vmatprep.subr.bf16.mxu0 0
    %749 = vmatpush2.bf16.msra.mxu0 %v526
    %750 = vmatprep.mubr.bf16.mxu0 %v78
    %751 = vmatmul.mubr.bf16.gmra.mxu0 %v77
    %v752 = vpop.f32.mrf.mxu0
    %v753 = vadd.f32 %v713, %v752
    %v754 = vpop.f32.mrf.mxu0
    %v755 = vpop.f32.mrf.mxu0
    %v756 = vpop.f32.mrf.mxu0
    %757 = vdwg.mxu0
    %v758 = vmul.f32 %v753, %v753
    %vm759 = vcmask 254976
    %v760 = vsel %vm759, %v758, 0.0
    %761 = vadd.xlane.f32.xlu0 %v760
    %v762 = vpop.xlane.xlu0 %761
    %v763 = vmax.f32 %v762, 1e-12
    %v764 = vrsqrt.pop %v763
    %v765 = vmul.f32 %v753, %v764
    %v766 = vld [vmem:[%s3] sm:$0xff]
    %v767 = vld [vmem:[%s3 + $0x8] sm:$0xff]
    %v768 = vld [vmem:[%s3 + $0x10] sm:$0xff]
    %v769 = vld [vmem:[%s3 + $0x18] sm:$0xff]
    %v770 = vld [vmem:[%s4] sm:$0x1]
    %v772 = vlaneseq
    %v773 = vshrl.u32 %v772, 7
    %v774 = vsub.s32 0, %v773
    %v775 = vrot.slane %v770, %v774
    %vm777 = vcmask 261120
    %v779 = vsel %vm777, %v765, 0
    %781 = vmatprep.subr.mxu0 0.0
    %782 = vmatpush1.msra.mxu0 0.0
    %783 = vmatprep.subr.mxu0 0.0
    %784 = vmatpush1.msra.mxu0 0.0
    %785 = vmatprep.subr.mxu0 0.0
    %786 = vmatpush1.msra.mxu0 0.0
    %787 = vmatprep.subr.mxu0 0.0
    %788 = vmatpush1.msra.mxu0 0.0
    %789 = vmatprep.subr.mxu0 0.0
    %790 = vmatpush1.msra.mxu0 0.0
    %791 = vmatprep.subr.mxu0 0.0
    %792 = vmatpush1.msra.mxu0 0.0
    %793 = vmatprep.subr.mxu0 0.0
    %794 = vmatpush1.msra.mxu0 0.0
    %795 = vmatprep.subr.mxu0 0.0
    %796 = vmatpush1.msra.mxu0 0.0
    %797 = vmatprep.subr.mxu0 0.0
    %798 = vmatpush1.msra.mxu0 0.0
    %799 = vmatprep.subr.mxu0 0.0
    %800 = vmatpush1.msra.mxu0 0.0
    %801 = vmatprep.subr.mxu0 0.0
    %802 = vmatpush1.msra.mxu0 0.0
    %803 = vmatprep.subr.mxu0 0.0
    %804 = vmatpush1.msra.mxu0 0.0
    %805 = vmatprep.subr.mxu0 0.0
    %806 = vmatpush1.msra.mxu0 %v769
    %807 = vmatprep.subr.mxu0 0.0
    %808 = vmatpush1.msra.mxu0 %v768
    %809 = vmatprep.subr.mxu0 0.0
    %810 = vmatpush1.msra.mxu0 %v767
    %811 = vmatprep.subr.mxu0 0.0
    %812 = vmatpush1.msra.mxu0 %v766
    %813 = vmatprep.subr.mxu0 0.0
    %814 = vmatpush2.msra.mxu0 0.0
    %815 = vmatprep.subr.mxu0 0.0
    %816 = vmatpush2.msra.mxu0 0.0
    %817 = vmatprep.subr.mxu0 0.0
    %818 = vmatpush2.msra.mxu0 0.0
    %819 = vmatprep.subr.mxu0 0.0
    %820 = vmatpush2.msra.mxu0 0.0
    %821 = vmatprep.subr.mxu0 0.0
    %822 = vmatpush2.msra.mxu0 0.0
    %823 = vmatprep.subr.mxu0 0.0
    %824 = vmatpush2.msra.mxu0 0.0
    %825 = vmatprep.subr.mxu0 0.0
    %826 = vmatpush2.msra.mxu0 0.0
    %827 = vmatprep.subr.mxu0 0.0
    %828 = vmatpush2.msra.mxu0 0.0
    %829 = vmatprep.subr.mxu0 0.0
    %830 = vmatpush2.msra.mxu0 0.0
    %831 = vmatprep.subr.mxu0 0.0
    %832 = vmatpush2.msra.mxu0 0.0
    %833 = vmatprep.subr.mxu0 0.0
    %834 = vmatpush2.msra.mxu0 0.0
    %835 = vmatprep.subr.mxu0 0.0
    %836 = vmatpush2.msra.mxu0 0.0
    %837 = vmatprep.subr.mxu0 0.0
    %838 = vmatpush2.msra.mxu0 0.0
    %839 = vmatprep.subr.mxu0 0.0
    %840 = vmatpush2.msra.mxu0 0.0
    %841 = vmatprep.subr.mxu0 0.0
    %842 = vmatpush2.msra.mxu0 0.0
    %843 = vmatprep.subr.mxu0 0.0
    %844 = vmatpush2.msra.mxu0 0.0
    %845 = vmatprep.mubr.f32.mxu0 0.0
    %846 = vmatmul.mubr.f32.gmra.mxu0 %v779
    %v847 = vpop.f32.mrf.mxu0
    %v848 = vadd.f32 %v775, %v847
    %v849 = vpop.f32.mrf.mxu0
    %850 = vdwg.mxu0
    %v851 = vlaneseq
    %v852 = vand.u32 %v851, 127
    %vm853 = vcmp.ge.s32.totalorder %v852, 16
    %v854 = vld [vmem:[%s5] sm:$0x3]
    %v855 = vsub.s32 %v852, 16
    %856 = vset.pattern.permute.xlu0 0
    %857 = vperm.xlu0 %856, %v854
    %v858 = vpop.permute.xlu0 %857
    %vm859 = vcmp.eq.s32.totalorder %v855, %v858
    %vm860 = vmand %vm853, %vm859
    %v861 = vmax.f32 %v848, -1.0
    %v862 = vmin.f32 %v861, 1.0
    %v863 = vmul.f32 %v862, %v862
    %v864 = vsub.f32 1.0, %v863
    %v865 = vmax.f32 %v864, 0.0
    %v866 = vrsqrt.pop %v865
    %v867 = vmul.f32 %v865, %v866
    %vm868 = vcmp.eq.f32.partialorder %v865, inf
    %v869 = vsel %vm868, %v865, %v867
    %vm870 = vcmp.eq.f32.partialorder %v865, 0.0
    %v871 = vand.u32 %v865, 2147483648
    %v872 = vsel %vm870, %v871, %v869
    %v873 = vmul.f32 %v862, 0.87758255
    %v874 = vmul.f32 %v872, 0.47942555
    %v875 = vsub.f32 %v873, %v874
    %v876 = vsub.f32 %v862, -0.87758255
    %vm877 = vcmp.le.f32.partialorder %v876, 0.0
    %v878 = vsub.f32 %v862, 0.23971277
    %v879 = vsel %vm877, %v878, %v875
    %v880 = vsel %vm860, %v879, %v862
    %v881 = vsel %vm853, %v880, %v848
    %v882 = vmul.f32 %v881, 64.0
    %884 = vrot.lane.b32.xlu0 %v882, 32
    %v885 = vpop.permute.xlu0 %884
    %v887 = vsel %vm777, %v753, %v885
    %vm888 = vcmask 517120
    %889 = vst.msk [vmem:[#allocation2] sm:$0x3] %vm888, %v887
    // Predicated region
    $region26: #{tpu_custom_call.1} parent=1 // pred_check
      _
    $region27: #{tpu_custom_call.1} parent=1 // pred_check_branch
      %891 = sbr.rel (0) target = $region29
    $region28: #{tpu_custom_call.1} parent=1 // pred_region
      %s893 = ssub.s32 32, 32
      %894 = vsyncadd [#allocation3], %s893
      %s896 = sshll.u32 [#allocation2], 4
      %s897 = int_to_ptr.vmem [resolvable:$true] %s896
      %899 = dma.vmem_to_hbm [thread:$0]  %s897, 32, %s6, [#allocation3]
    $region29: #{tpu_custom_call.1} parent=1 // pred_fallthru
      _
    // Predicated region
    $region30: #{tpu_custom_call.1} parent=1 // pred_check
      _
    $region31: #{tpu_custom_call.1} parent=1 // pred_check_branch
      %901 = sbr.rel (0) target = $region33
    $region32: #{tpu_custom_call.1} parent=1 // pred_region
      %902 = dma.done [#allocation3], 32
    $region33: #{tpu_custom_call.1} parent=1 // pred_fallthru
      _
    %903 = vsyncpa [#allocation3], 1

</llo_original>
